<compile_context>
chip_gen: v7x
topology: tpu7x:2x2x1
jax: 0.10.0
libtpu: 0.0.40
codegen_flags: <defaults>
</compile_context>

<pallas_src>
import functools

import jax
import jax.numpy as jnp
from jax.experimental import pallas as pl
from jax.experimental.pallas import tpu as pltpu

EPS = 1e-5
_PASS1_BLOCK_BYTES = 4 * 1024 * 1024   # f32 bytes per reduction tile
_PASS2_BLOCK_BYTES = 2 * 1024 * 1024   # f32 bytes per normalize tile


def _cdiv(a, b):
    return -(-a // b)


def _vmem_limit_bytes():
    """Generation-aware VMEM budget (v5e/v6e: 128 MiB, v7x: 64 MiB)."""
    try:
        cap = int(pltpu.get_tpu_info().vmem_capacity_bytes)
    except Exception:                      # non-TPU trace / older API
        cap = 64 * 1024 * 1024
    return max(32 * 1024 * 1024, (cap * 3) // 4)


def _pick_layout(total, last_dim):
    """Lane-dense 2D view with rows*C == total (free reshape, no padding)."""
    for cand in (512, 256, 128):
        if total % cand == 0:
            return total // cand, cand
    c = max(int(last_dim), 1)              # natural trailing dim always divides
    return total // c, c


def _pick_block_rows(rows, C, target_bytes, sub):
    per_row = C * 4
    br = max(sub, target_bytes // per_row)
    br = max(sub, br - br % sub)
    return rows if br >= rows else int(br)


# --------------------------------------------------------------------------
# Kernels
# --------------------------------------------------------------------------
def _reduce_kernel(x_ref, sum_ref, sq_ref, *, rows, block, tiles_per_core,
                   full_tiles, needs_mask):
    """Pass 1: per-tile sublane reduction accumulated into (8, C) partials."""
    c = pl.program_id(0)                   # core split ("parallel")
    i = pl.program_id(1)                   # reduction step ("arbitrary")

    @pl.when(i == 0)
    def _():
        sum_ref[...] = jnp.zeros_like(sum_ref)
        sq_ref[...] = jnp.zeros_like(sq_ref)

    def accumulate(xv):
        # Per-tile tree reduce along sublanes (VALU adds + one XLU reduce),
        # then accumulate the tiny (1, C) partials -> no full-tile accumulator
        # read-modify-write per element.
        sum_ref[0:1, :] += jnp.sum(xv, axis=0, keepdims=True)
        sq_ref[0:1, :] += jnp.sum(xv * xv, axis=0, keepdims=True)

    xv = x_ref[...].astype(jnp.float32)
    t = c * tiles_per_core + i             # logical tile index

    if not needs_mask:                     # static: every tile fully valid
        accumulate(xv)
    else:
        @pl.when(t < full_tiles)
        def _():
            accumulate(xv)

        @pl.when(t >= full_tiles)          # ragged or fully out-of-range tile
        def _():
            valid = rows - t * block       # may be <= 0 for fully-OOB tiles
            ridx = jax.lax.broadcasted_iota(jnp.int32, xv.shape, 0)
            accumulate(jnp.where(ridx < valid, xv, 0.0))


def _normalize_kernel(gamma_ref, beta_ref, sum_ref, sq_ref, x_ref, o_ref, *,
                      count, eps):
    """Pass 2: fold stats -> scale/shift in-kernel; y = x*scale + shift."""
    s = jnp.sum(sum_ref[...])
    q = jnp.sum(sq_ref[...])
    mean = s / count
    # Streaming path uses E[x^2] - mean^2 (clamped).  This can lose precision
    # vs PyTorch's centered variance when |mean| >> std; a full extra data
    # pass would be required to match it exactly.
    var = jnp.maximum(q / count - mean * mean, 0.0)
    inv = jax.lax.rsqrt(var + eps)
    scale = gamma_ref[0, 0] * inv
    shift = beta_ref[0, 0] - mean * scale
    o_ref[...] = (x_ref[...].astype(jnp.float32) * scale + shift).astype(o_ref.dtype)


def _fused_kernel(gamma_ref, beta_ref, x_ref, o_ref, *, count, eps):
    """Single pass: x resident in VMEM; centered (PyTorch-style) variance."""
    xv = x_ref[...].astype(jnp.float32)
    mean = jnp.sum(xv) / count
    d = xv - mean
    var = jnp.sum(d * d) / count           # biased, centered
    inv = jax.lax.rsqrt(var + eps)
    scale = gamma_ref[0, 0] * inv
    o_ref[...] = (d * scale + beta_ref[0, 0]).astype(o_ref.dtype)


# --------------------------------------------------------------------------
# Wrapper
# --------------------------------------------------------------------------
def set_batch_norm(x, gamma, beta, *, eps=EPS, block_rows=None,
                   single_pass_max_bytes=None):
    """x: (B, N, D) float array. gamma/beta: shape (1,) BatchNorm2d(1) params."""
    orig_shape = x.shape
    orig_dtype = x.dtype
    total = int(x.size)
    itemsize = jnp.dtype(orig_dtype).itemsize
    sub = {4: 8, 2: 16, 1: 32}.get(itemsize, 8)

    rows, C = _pick_layout(total, orig_shape[-1] if x.ndim else 1)
    x2 = x.reshape(rows, C)                 # free: rows * C == total, no pad

    g = jnp.asarray(gamma, jnp.float32).reshape(-1)[0].reshape(1, 1)
    b = jnp.asarray(beta, jnp.float32).reshape(-1)[0].reshape(1, 1)

    vmem_limit = _vmem_limit_bytes()
    if single_pass_max_bytes is None:
        # Fused path holds an f32 copy (+ temps) of the whole slab in VMEM,
        # so budget ~1/4 of the scoped limit for the f32 slab itself.
        single_pass_max_bytes = vmem_limit // 4
    count = float(total)

    if total * 4 <= single_pass_max_bytes:
        # ---- fused single-pass: 1 read + 1 write of x, centered variance ----
        y2 = pl.pallas_call(
            functools.partial(_fused_kernel, count=count, eps=float(eps)),
            out_shape=jax.ShapeDtypeStruct((rows, C), orig_dtype),
            grid_spec=pltpu.PrefetchScalarGridSpec(
                num_scalar_prefetch=0,
                grid=(1,),
                in_specs=[
                    pl.BlockSpec(memory_space=pltpu.SMEM),   # gamma
                    pl.BlockSpec(memory_space=pltpu.SMEM),   # beta
                    pl.BlockSpec((rows, C), lambda i: (0, 0)),
                ],
                out_specs=pl.BlockSpec((rows, C), lambda i: (0, 0)),
            ),
            compiler_params=pltpu.CompilerParams(
                dimension_semantics=("arbitrary",),
                vmem_limit_bytes=vmem_limit,
            ),
        )(g, b, x2)
        return y2.reshape(orig_shape)

    # ------------------------ two-pass streaming path ------------------------
    # Pass-1 tile (~4 MiB f32) amortizes per-step overhead; accumulators freed.
    if block_rows is None:
        blk1 = _pick_block_rows(rows, C, _PASS1_BLOCK_BYTES, sub)
    else:
        blk1 = min(int(block_rows), rows)
        if blk1 < rows:
            blk1 = max(sub, blk1 - blk1 % sub)
    n_tiles1 = _cdiv(rows, blk1)
    n_splits = 2 if n_tiles1 >= 2 else 1    # shard the reduction across TCs (v7x)
    tiles_per_core = _cdiv(n_tiles1, n_splits)
    full_tiles = rows // blk1               # tiles with every row in-bounds
    needs_mask = (n_splits * tiles_per_core) > full_tiles

    sums, sqs = pl.pallas_call(
        functools.partial(_reduce_kernel, rows=rows, block=blk1,
                          tiles_per_core=tiles_per_core,
                          full_tiles=full_tiles, needs_mask=needs_mask),
        out_shape=(
            jax.ShapeDtypeStruct((8 * n_splits, C), jnp.float32),
            jax.ShapeDtypeStruct((8 * n_splits, C), jnp.float32),
        ),
        grid_spec=pltpu.PrefetchScalarGridSpec(
            num_scalar_prefetch=0,
            grid=(n_splits, tiles_per_core),
            in_specs=[pl.BlockSpec(
                (blk1, C),
                lambda c, i: (jnp.minimum(c * tiles_per_core + i, n_tiles1 - 1), 0))],
            out_specs=(
                pl.BlockSpec((8, C), lambda c, i: (c, 0)),
                pl.BlockSpec((8, C), lambda c, i: (c, 0)),
            ),
        ),
        compiler_params=pltpu.CompilerParams(
            dimension_semantics=("parallel", "arbitrary"),
            vmem_limit_bytes=vmem_limit,
        ),
    )(x2)

    # Pass 2: stats -> scale/shift folded into the kernel (no host glue ops).
    if block_rows is None:
        blk2 = _pick_block_rows(rows, C, _PASS2_BLOCK_BYTES, sub)
    else:
        blk2 = min(int(block_rows), rows)
        if blk2 < rows:
            blk2 = max(sub, blk2 - blk2 % sub)
    n_tiles2 = _cdiv(rows, blk2)

    y2 = pl.pallas_call(
        functools.partial(_normalize_kernel, count=count, eps=float(eps)),
        out_shape=jax.ShapeDtypeStruct((rows, C), orig_dtype),
        grid_spec=pltpu.PrefetchScalarGridSpec(
            num_scalar_prefetch=0,
            grid=(n_tiles2,),
            in_specs=[
                pl.BlockSpec(memory_space=pltpu.SMEM),             # gamma
                pl.BlockSpec(memory_space=pltpu.SMEM),             # beta
                pl.BlockSpec((8 * n_splits, C), lambda i: (0, 0)),  # sums
                pl.BlockSpec((8 * n_splits, C), lambda i: (0, 0)),  # sumsqs
                pl.BlockSpec((blk2, C), lambda i: (i, 0)),
            ],
            out_specs=pl.BlockSpec((blk2, C), lambda i: (i, 0)),
        ),
        compiler_params=pltpu.CompilerParams(
            dimension_semantics=("parallel",),
            vmem_limit_bytes=vmem_limit,
        ),
    )(g, b, sums, sqs, x2)
    return y2.reshape(orig_shape)


def set_batch_norm_ref(x, gamma, beta, eps=EPS):
    """Pure-JAX reference matching BatchNorm2d(1) in training mode."""
    xf = x.astype(jnp.float32)
    mean = jnp.mean(xf)
    var = jnp.mean((xf - mean) ** 2)        # biased
    g = jnp.asarray(gamma, jnp.float32).reshape(-1)[0]
    b = jnp.asarray(beta, jnp.float32).reshape(-1)[0]
    y = (xf - mean) * jax.lax.rsqrt(var + eps) * g + b
    return y.astype(x.dtype)


if __name__ == "__main__":
    # Deterministic BatchNorm2d(1) parameter init: weight=1, bias=0.
    gamma = jnp.ones((1,), dtype=jnp.float32)
    beta = jnp.zeros((1,), dtype=jnp.float32)

    # Case 1: small set input (B, N, D) -> fused single-pass resident kernel.
    x = jax.random.normal(jax.random.PRNGKey(0), (2, 8, 32), dtype=jnp.float32)
    y = jax.block_until_ready(set_batch_norm(x, gamma, beta))
    y_ref = set_batch_norm_ref(x, gamma, beta)
    assert y.shape == x.shape and y.dtype == x.dtype
    assert jnp.allclose(y, y_ref, atol=1e-4, rtol=1e-4)

    # Case 2: force the streaming two-pass path; total not divisible by 128 so
    # the layout falls back to C=D=100 and the last reduction tile is ragged
    # (masked in-kernel, no host padding).
    x_big = jax.random.normal(jax.random.PRNGKey(1), (3, 40, 100),
                              dtype=jnp.float32) * 2.0 + 1.5
    y_big = jax.block_until_ready(
        set_batch_norm(x_big, gamma, beta, block_rows=16,
                       single_pass_max_bytes=0))
    y_big_ref = set_batch_norm_ref(x_big, gamma, beta)
    assert y_big.shape == x_big.shape and y_big.dtype == x_big.dtype
    assert jnp.allclose(y_big, y_big_ref, atol=1e-3, rtol=1e-3)

    # Case 3: two-pass path with the lane-dense C=512 re-layout, a ragged last
    # tile, and a core-split whose second chunk is partially out-of-range.
    x_med = jax.random.normal(jax.random.PRNGKey(2), (4, 24, 64),
                              dtype=jnp.float32) - 0.5
    y_med = jax.block_until_ready(
        set_batch_norm(x_med, gamma, beta, block_rows=8,
                       single_pass_max_bytes=0))
    y_med_ref = set_batch_norm_ref(x_med, gamma, beta)
    assert y_med.shape == x_med.shape and y_med.dtype == x_med.dtype
    assert jnp.allclose(y_med, y_med_ref, atol=1e-4, rtol=1e-4)

    print("KERNEL_OK")
</pallas_src>

<mosaic_0001>
module attributes {stable_mosaic.version = 11 : i64} {
  func.func @_fused_kernel(%arg0: i32, %arg1: memref<1x1xf32, #tpu.memory_space<smem>>, %arg2: memref<1x1xf32, #tpu.memory_space<smem>>, %arg3: memref<1x512xf32, #tpu.memory_space<vmem>>, %arg4: memref<1x512xf32, #tpu.memory_space<vmem>>) attributes {dimension_semantics = [#tpu.dimension_semantics<arbitrary>], iteration_bounds = array<i64: 1>, scalar_prefetch = 0 : i64, scratch_operands = 0 : i64, tpu.core_type = #tpu.core_type<tc>, window_params = [{transform_indices = @transform_0, window_bounds = array<i64: 1, 1>}, {transform_indices = @transform_1, window_bounds = array<i64: 1, 1>}, {pipeline_mode = #tpu.pipeline_mode<synchronous>, transform_indices = @transform_2, window_bounds = array<i64: 1, 512>}, {pipeline_mode = #tpu.pipeline_mode<synchronous>, transform_indices = @transform_3, window_bounds = array<i64: 1, 512>}]} {
    %c0 = arith.constant 0 : index
    %c0_0 = arith.constant 0 : index
    %0 = vector.load %arg3[%c0, %c0_0] : memref<1x512xf32, #tpu.memory_space<vmem>>, vector<1x512xf32>
    %1 = vector.shape_cast %0 : vector<1x512xf32> to vector<1x1x512xf32>
    %cst = arith.constant dense<0.000000e+00> : vector<1xf32>
    %2 = vector.multi_reduction <add>, %1, %cst [1, 2] : vector<1x1x512xf32> to vector<1xf32>
    %3 = vector.shape_cast %2 : vector<1xf32> to vector<1x1x1xf32>
    %4 = vector.extract %3[0, 0, 0] : f32 from vector<1x1x1xf32>
    %cst_1 = arith.constant 5.120000e+02 : f32
    %5 = arith.divf %4, %cst_1 : f32
    %6 = vector.broadcast %5 : f32 to vector<1x512xf32>
    %7 = arith.subf %0, %6 : vector<1x512xf32>
    %8 = arith.mulf %7, %7 : vector<1x512xf32>
    %9 = vector.shape_cast %8 : vector<1x512xf32> to vector<1x1x512xf32>
    %cst_2 = arith.constant dense<0.000000e+00> : vector<1xf32>
    %10 = vector.multi_reduction <add>, %9, %cst_2 [1, 2] : vector<1x1x512xf32> to vector<1xf32>
    %11 = vector.shape_cast %10 : vector<1xf32> to vector<1x1x1xf32>
    %12 = vector.extract %11[0, 0, 0] : f32 from vector<1x1x1xf32>
    %cst_3 = arith.constant 5.120000e+02 : f32
    %13 = arith.divf %12, %cst_3 : f32
    %cst_4 = arith.constant 9.99999974E-6 : f32
    %14 = arith.addf %13, %cst_4 : f32
    %15 = math.rsqrt %14 : f32
    %c0_5 = arith.constant 0 : index
    %c0_6 = arith.constant 0 : index
    %16 = memref.load %arg1[%c0_5, %c0_6] : memref<1x1xf32, #tpu.memory_space<smem>>
    %17 = arith.mulf %16, %15 : f32
    %18 = vector.broadcast %17 : f32 to vector<1x512xf32>
    %19 = arith.mulf %7, %18 : vector<1x512xf32>
    %c0_7 = arith.constant 0 : index
    %c0_8 = arith.constant 0 : index
    %20 = memref.load %arg2[%c0_7, %c0_8] : memref<1x1xf32, #tpu.memory_space<smem>>
    %21 = vector.broadcast %20 : f32 to vector<1x512xf32>
    %22 = arith.addf %19, %21 : vector<1x512xf32>
    %c0_9 = arith.constant 0 : index
    %c0_10 = arith.constant 0 : index
    %23 = vector.load %arg4[%c0_9, %c0_10] : memref<1x512xf32, #tpu.memory_space<vmem>>, vector<1x512xf32>
    tpu.vector_store %arg4[%c0_9, %c0_10], %22 {strides = array<i32>} : memref<1x512xf32, #tpu.memory_space<vmem>>, vector<1x512xf32>,
    return
  }
  func.func @transform_0(%arg0: i32) -> (i32, i32) {
    %c0_i32 = arith.constant 0 : i32
    %c0_i32_0 = arith.constant 0 : i32
    %c0_i32_1 = arith.constant 0 : i32
    return %c0_i32, %c0_i32_0 : i32, i32
  }
  func.func @transform_1(%arg0: i32) -> (i32, i32) {
    %c0_i32 = arith.constant 0 : i32
    %c0_i32_0 = arith.constant 0 : i32
    %c0_i32_1 = arith.constant 0 : i32
    return %c0_i32, %c0_i32_0 : i32, i32
  }
  func.func @transform_2(%arg0: i32) -> (i32, i32) {
    %c0_i32 = arith.constant 0 : i32
    %c0_i32_0 = arith.constant 0 : i32
    %c0_i32_1 = arith.constant 0 : i32
    return %c0_i32, %c0_i32_0 : i32, i32
  }
  func.func @transform_3(%arg0: i32) -> (i32, i32) {
    %c0_i32 = arith.constant 0 : i32
    %c0_i32_0 = arith.constant 0 : i32
    %c0_i32_1 = arith.constant 0 : i32
    return %c0_i32, %c0_i32_0 : i32, i32
  }
}

</mosaic_0001>

<llo_original>
// kernel: tpu_custom_call.1
$region0: #{tpu_custom_call.1}
  #allocation0 [shape = 'u32[]', space=smem, size = 0x4, offset = 0x4, fixed_abs, tag = 'smem constant byte address 0x4 - core index']
  #allocation1 [shape = 'u32[144,128]{1,0:T(1,128)}', space=vmem, size = 0x12000, scoped, tag = 'internal scratch']
  #allocation2 [shape = 'f32[1,1]{1,0:T(1,128)S(6)}', space=smem, size = 0x200, scoped, tag = 'scoped memory for tpu_custom_call.1']
  #allocation3 [shape = 'f32[1,1]{1,0:T(1,128)S(6)}', space=smem, size = 0x200, scoped, tag = 'scoped memory for tpu_custom_call.1']
  %s0 = inlined_call_operand.<no memory space> [shape: f32[1,1], index: 0, kind: input, shape index: {}]
  %s1 = inlined_call_operand.<no memory space> [shape: f32[1,1], index: 1, kind: input, shape index: {}]
  %s2 = inlined_call_operand.vmem [shape: f32[1,512], index: 2, kind: input, shape index: {}]
  %s3 = inlined_call_operand.hbm [shape: f32[1,512], index: 3, kind: output, shape index: {}]
  %s4 = sld [smem:[#allocation0]]
  $region22: #{tpu_custom_call.1} parent=0
    _
  %s6 = ssub.s32 1, %s4
  %s7 = scalar_select 0, %s6, %s4
  %8 = sst [smem:[#allocation2]] %s0
  %9 = sst [smem:[#allocation3]] %s1
  $region1: #{tpu_custom_call.1} parent=0
    #allocation4 [shape = 'u8[2048]{0}', space=vmem, size = 0x800, scoped, tag = 'output window, operand 0, single buffered']
    #allocation5 [shape = 's32[1]{0}', space=sflag, size = 0x4, scoped, tag = 'scoped memory for tpu_custom_call.1']
    %10 = vsyncpa [#allocation5], 0
    // Predicated region
    $region2: #{tpu_custom_call.1} parent=1 // pred_check
      _
    $region3: #{tpu_custom_call.1} parent=1 // pred_check_branch
      %12 = sbr.rel (0) target = $region5
    $region4: #{tpu_custom_call.1} parent=1 // pred_region
      _
    $region5: #{tpu_custom_call.1} parent=1 // pred_fallthru
      _
    // Predicated region
    $region6: #{tpu_custom_call.1} parent=1 // pred_check
      _
    $region7: #{tpu_custom_call.1} parent=1 // pred_check_branch
      %14 = sbr.rel (0) target = $region9
    $region8: #{tpu_custom_call.1} parent=1 // pred_region
      _
    $region9: #{tpu_custom_call.1} parent=1 // pred_fallthru
      _
    // Predicated region
    $region10: #{tpu_custom_call.1} parent=1 // pred_check
      _
    $region11: #{tpu_custom_call.1} parent=1 // pred_check_branch
      %16 = sbr.rel (0) target = $region13
    $region12: #{tpu_custom_call.1} parent=1 // pred_region
      _
    $region13: #{tpu_custom_call.1} parent=1 // pred_fallthru
      _
    %v17 = vld [vmem:[%s2] sm:$0xf]
    %v19 = vlaneseq
    %v20 = vshrl.u32 %v19, 7
    %v21 = vsub.s32 0, %v20
    %v22 = vrot.slane %v17, %v21
    %v23 = vlaneseq
    %v24 = vshrl.u32 %v23, 7
    %v25 = vsub.s32 1, %v24
    %v26 = vrot.slane %v17, %v25
    %v27 = vlaneseq
    %v28 = vshrl.u32 %v27, 7
    %v29 = vsub.s32 2, %v28
    %v30 = vrot.slane %v17, %v29
    %v31 = vlaneseq
    %v32 = vshrl.u32 %v31, 7
    %v33 = vsub.s32 3, %v32
    %v34 = vrot.slane %v17, %v33
    %vm39 = vcmask 1040384
    %v40 = vsel %vm39, %v22, 0.0
    %v41 = vsel %vm39, %v26, 0.0
    %v42 = vadd.f32 %v40, %v41
    %v43 = vsel %vm39, %v30, 0.0
    %v44 = vadd.f32 %v42, %v43
    %v45 = vsel %vm39, %v34, 0.0
    %v46 = vadd.f32 %v44, %v45
    %47 = vadd.xlane.f32.xlu0 %v46
    %v48 = vpop.xlane.xlu0 %47
    %v49 = vrot.slane %v48, 4
    %v50 = vadd.f32 %v48, %v49
    %v51 = vrot.slane %v50, 2
    %v52 = vadd.f32 %v50, %v51
    %v53 = vrot.slane %v52, 1
    %v54 = vadd.f32 %v52, %v53
    %s55 = vtos %v54
    %v56 = vrcp.pop 512.0
    %s57 = vtos %v56
    %s58 = smul.f32 %s55, %s57
    %v59 = vstv %s58
    %v60 = vsub.f32 %v17, %v59
    %v61 = vmul.f32 %v60, %v60
    %v63 = vlaneseq
    %v64 = vshrl.u32 %v63, 7
    %v65 = vsub.s32 0, %v64
    %v66 = vrot.slane %v61, %v65
    %v67 = vlaneseq
    %v68 = vshrl.u32 %v67, 7
    %v69 = vsub.s32 1, %v68
    %v70 = vrot.slane %v61, %v69
    %v71 = vlaneseq
    %v72 = vshrl.u32 %v71, 7
    %v73 = vsub.s32 2, %v72
    %v74 = vrot.slane %v61, %v73
    %v75 = vlaneseq
    %v76 = vshrl.u32 %v75, 7
    %v77 = vsub.s32 3, %v76
    %v78 = vrot.slane %v61, %v77
    %v83 = vsel %vm39, %v66, 0.0
    %v84 = vsel %vm39, %v70, 0.0
    %v85 = vadd.f32 %v83, %v84
    %v86 = vsel %vm39, %v74, 0.0
    %v87 = vadd.f32 %v85, %v86
    %v88 = vsel %vm39, %v78, 0.0
    %v89 = vadd.f32 %v87, %v88
    %90 = vadd.xlane.f32.xlu0 %v89
    %v91 = vpop.xlane.xlu0 %90
    %v92 = vrot.slane %v91, 4
    %v93 = vadd.f32 %v91, %v92
    %v94 = vrot.slane %v93, 2
    %v95 = vadd.f32 %v93, %v94
    %v96 = vrot.slane %v95, 1
    %v97 = vadd.f32 %v95, %v96
    %s98 = vtos %v97
    %v99 = vrcp.pop 512.0
    %s100 = vtos %v99
    %s101 = smul.f32 %s98, %s100
    %s102 = sadd.f32 %s101, 1e-05
    %v103 = vstv %s102
    %v104 = vrsqrt.pop %v103
    %s105 = vtos %v104
    %s106 = sld [smem:[#allocation2]]
    %s107 = smul.f32 %s106, %s105
    %v108 = vstv %s107
    %v109 = vmul.f32 %v60, %v108
    %s110 = sld [smem:[#allocation3]]
    %v111 = vstv %s110
    %v112 = vadd.f32 %v109, %v111
    %v113 = vlaneseq
    %vm114 = vcmp.ge.s32.totalorder %v113, 0
    %vm115 = vcmp.lt.s32.totalorder %v113, 512
    %vm116 = vmand %vm114, %vm115
    %117 = vst.msk [vmem:[#allocation4] sm:$0xf] %vm116, %v112
    // Predicated region
    $region14: #{tpu_custom_call.1} parent=1 // pred_check
      _
    $region15: #{tpu_custom_call.1} parent=1 // pred_check_branch
      %119 = sbr.rel (0) target = $region17
    $region16: #{tpu_custom_call.1} parent=1 // pred_region
      %s121 = ssub.s32 64, 64
      %122 = vsyncadd [#allocation5], %s121
      %s124 = sshll.u32 [#allocation4], 4
      %s125 = int_to_ptr.vmem [resolvable:$true] %s124
      %127 = dma.vmem_to_hbm [thread:$0]  %s125, 64, %s3, [#allocation5]
    $region17: #{tpu_custom_call.1} parent=1 // pred_fallthru
      _
    // Predicated region
    $region18: #{tpu_custom_call.1} parent=1 // pred_check
      _
    $region19: #{tpu_custom_call.1} parent=1 // pred_check_branch
      %129 = sbr.rel (0) target = $region21
    $region20: #{tpu_custom_call.1} parent=1 // pred_region
      %130 = dma.done [#allocation5], 64
    $region21: #{tpu_custom_call.1} parent=1 // pred_fallthru
      _
    %131 = vsyncpa [#allocation5], 1

</llo_original>
